<compile_context>
chip_gen: v7x
topology: tpu7x:2x2x1
jax: 0.10.0
libtpu: 0.0.40
codegen_flags: <defaults>
</compile_context>

<pallas_src>
import functools

import jax
import jax.numpy as jnp
from jax.experimental import pallas as pl
from jax.experimental.pallas import tpu as pltpu


_SLACK_BYTES = 2 * 1024 * 1024


def _cdiv(a, b):
    return -(-a // b)


def _round_up(v, m):
    return ((v + m - 1) // m) * m


def _vmem_budgets():
    """Chip-dependent (block budget, vmem_limit_bytes)."""
    cap = 0
    try:
        cap = int(pltpu.get_tpu_info().vmem_capacity_bytes)
    except Exception:
        cap = 0
    if cap <= 0:
        cap = 64 * 1024 * 1024            # conservative default (v7x-sized VMEM)
    # 48 MiB / 96 MiB on 128-MiB parts (v5e/v6e); 24 MiB / 48 MiB on v7x.
    return (cap * 3) // 8, (cap * 3) // 4


def _align_corners_matrix(out_size, in_size):
    """Row-stochastic (out_size, in_size) bilinear matrix, align_corners=True."""
    if out_size == 1 or in_size == 1:
        idx0 = jnp.zeros((out_size,), dtype=jnp.int32)
        return jax.nn.one_hot(idx0, in_size, dtype=jnp.float32)
    scale = (in_size - 1) / (out_size - 1)
    src = jnp.arange(out_size, dtype=jnp.float32) * jnp.float32(scale)
    i0 = jnp.clip(jnp.floor(src).astype(jnp.int32), 0, in_size - 1)
    i1 = jnp.clip(i0 + 1, 0, in_size - 1)
    w1 = src - i0.astype(jnp.float32)
    w0 = 1.0 - w1
    return (w0[:, None] * jax.nn.one_hot(i0, in_size, dtype=jnp.float32)
            + w1[:, None] * jax.nn.one_hot(i1, in_size, dtype=jnp.float32))


def _choose_bp(nc, free_bytes, per_plane_bytes, align):
    """Plane-block size: as large as the VMEM budget allows, aligned, capped at
    ~ceil(nc/2) so a 2-TensorCore chip (v7x) gets at least two grid steps."""
    bp = max(int(free_bytes) // max(int(per_plane_bytes), 1), 1)
    bp = min(bp, 1024)
    if nc > align:
        bp = min(bp, _round_up(_cdiv(nc, 2), align))
    if bp >= nc:
        return nc                        # block == full extent (always layout-legal)
    if bp < align:
        return align                     # pathological plane size; limit has headroom
    return bp - bp % align


# ---------------------------------------------------------------------------
# Path A: fused Kron matmul — one lane-dense 2D MXU matmul per plane block.
# ---------------------------------------------------------------------------
def _kron_kernel(x_ref, wk_ref, o_ref, *, mxu_dtype):
    # x_ref: (Bp, Hin*Win)   wk_ref: (Hin*Win, Hout*Wout)   o_ref: (Bp, Hout*Wout)
    o_ref[...] = jnp.dot(x_ref[...].astype(mxu_dtype), wk_ref[...],
                         preferred_element_type=jnp.float32).astype(o_ref.dtype)


# ---------------------------------------------------------------------------
# Path B: two chained 2D MXU matmuls with the plane batch folded into M.
# ---------------------------------------------------------------------------
def _two_stage_kernel(w1_ref, w2_ref, x_ref, o_ref, *, h_first, mxu_dtype):
    """h_first=True : w1 = Wh^T (Hin, Hout) in mxu_dtype, w2 = Ww^T (Win, TW) f32.
       h_first=False: w1 = Ww^T (Win, TW)  in mxu_dtype, w2 = Wh^T (Hin, Hout) f32."""
    bp, hin, win = x_ref.shape
    hout = o_ref.shape[1]
    tw = o_ref.shape[2]
    x = x_ref[...].astype(mxu_dtype)
    if h_first:
        # H stage: (Bp*Win, Hin) @ (Hin, Hout); only minor-dims swaps (XLU) of
        # the small input block and of the f32 intermediate are needed.
        xt = jnp.swapaxes(x, 1, 2).reshape(bp * win, hin)
        t = jnp.dot(xt, w1_ref[...], preferred_element_type=jnp.float32)
        t = jnp.swapaxes(t.reshape(bp, win, hout), 1, 2).reshape(bp * hout, win)
        # W stage, f32 operands (keeps bf16-input numerics close to torch).
        out = jnp.dot(t, w2_ref[...], preferred_element_type=jnp.float32)
        o_ref[...] = out.reshape(bp, hout, tw).astype(o_ref.dtype)
    else:
        # W stage first (used when Wout is lane-tiled): (Bp*Hin, Win) @ (Win, TW).
        t = jnp.dot(x.reshape(bp * hin, win), w1_ref[...],
                    preferred_element_type=jnp.float32)
        t = jnp.swapaxes(t.reshape(bp, hin, tw), 1, 2).reshape(bp * tw, hin)
        # H stage, f32 operands.
        out = jnp.dot(t, w2_ref[...], preferred_element_type=jnp.float32)
        o_ref[...] = jnp.swapaxes(out.reshape(bp, tw, hout), 1, 2).astype(o_ref.dtype)


def upsample_predictor(x, target, *, kron_max_bytes=4 * 1024 * 1024,
                       allow_bf16_matmul=False):
    """Pallas-TPU equivalent of UpsamplePredictor.forward(input, target).

    x:      (N, C, Hin, Win) NCHW (or list/tuple; last element used)
    target: (N, *, Hout, Wout) — only its spatial size is used.
    returns (N, C, Hout, Wout) with x's dtype.
    """
    if isinstance(x, (list, tuple)):
        x = x[-1]
    N, C, Hin, Win = map(int, x.shape)
    Hout, Wout = int(target.shape[2]), int(target.shape[3])
    orig_dtype = jnp.dtype(x.dtype)

    if (Hin, Win) == (Hout, Wout):
        return x                          # align_corners identity mapping

    # dtype plumbing: f32/bf16 preserved end-to-end, other floats compute in f32.
    if orig_dtype == jnp.dtype(jnp.bfloat16):
        x_k, kernel_out_dtype, mxu_dtype = x, jnp.bfloat16, jnp.bfloat16
    elif orig_dtype == jnp.dtype(jnp.float32):
        x_k, kernel_out_dtype = x, jnp.float32
        mxu_dtype = jnp.bfloat16 if allow_bf16_matmul else jnp.float32
    else:
        x_k, kernel_out_dtype, mxu_dtype = x.astype(jnp.float32), jnp.float32, jnp.float32
    x_isz = jnp.dtype(x_k.dtype).itemsize
    o_isz = jnp.dtype(kernel_out_dtype).itemsize
    w_isz = jnp.dtype(mxu_dtype).itemsize

    wh = _align_corners_matrix(Hout, Hin)            # (Hout, Hin) f32
    ww = _align_corners_matrix(Wout, Win)            # (Wout, Win) f32

    NC = N * C
    sin, sout = Hin * Win, Hout * Wout
    budget, vmem_limit = _vmem_budgets()

    # ---- Path A: fused Kron matmul (small inputs, stays memory-bound) -------
    kron_sin_cap = 256 if mxu_dtype == jnp.bfloat16 else 128   # roofline gate (v5e)
    use_kron = (sin * sout * w_isz <= kron_max_bytes) and (sin <= kron_sin_cap)

    if use_kron:
        # Wk[h*Win + w, o*Wout + p] = Wh[o, h] * Ww[p, w]
        wk = jnp.einsum('oh,pw->hwop', wh, ww).reshape(sin, sout).astype(mxu_dtype)
        x2 = x_k.reshape(NC, sin)

        align = 16 if x_k.dtype == jnp.bfloat16 else 8
        fixed = 2 * sin * sout * w_isz + _SLACK_BYTES           # resident Wk (2 bufs)
        per_plane = 2 * sin * x_isz + 2 * sout * o_isz + sout * 4
        bp = _choose_bp(NC, budget - fixed, per_plane, align)
        nb = _cdiv(NC, bp)

        cost = pl.CostEstimate(
            flops=int(2 * nb * bp * sin * sout),
            transcendentals=0,
            bytes_accessed=int(NC * sin * x_isz + NC * sout * o_isz
                               + sin * sout * w_isz))

        out2 = pl.pallas_call(
            functools.partial(_kron_kernel, mxu_dtype=mxu_dtype),
            out_shape=jax.ShapeDtypeStruct((NC, sout), kernel_out_dtype),
            grid_spec=pltpu.PrefetchScalarGridSpec(
                num_scalar_prefetch=0,
                grid=(nb,),
                in_specs=[
                    pl.BlockSpec((bp, sin), lambda b: (b, 0)),
                    pl.BlockSpec((sin, sout), lambda b: (0, 0)),   # resident Wk
                ],
                out_specs=pl.BlockSpec((bp, sout), lambda b: (b, 0)),
            ),
            compiler_params=pltpu.CompilerParams(
                dimension_semantics=("parallel",),
                vmem_limit_bytes=int(vmem_limit)),
            cost_estimate=cost,
        )(x2, wk)
        out = out2.reshape(N, C, Hout, Wout)
        return out if jnp.dtype(kernel_out_dtype) == orig_dtype else out.astype(orig_dtype)

    # ---- Path B: two chained 2D MXU matmuls over a plane block --------------
    x3 = x_k.reshape(NC, Hin, Win)
    whT = wh.T                                        # (Hin, Hout) f32
    wwt = ww.T                                        # (Win, Wout) f32

    # Contraction order by MXU FLOPs (H-first also relayouts the smaller tensor).
    h_cost = Hout * Win * (Hin + Wout)
    w_cost = Hin * Wout * (Win + Hout)
    h_first = h_cost <= w_cost

    def per_plane_bytes(h_first_, tw_):
        if h_first_:
            return (3 * Hin * Win * x_isz            # x block (2 bufs) + swapped copy
                    + 2 * Hout * tw_ * o_isz         # out block (2 bufs)
                    + 2 * Win * Hout * 4             # stage-1 f32 result + relayout
                    + Hout * tw_ * 4)                # stage-2 f32 result before cast
        return (2 * Hin * Win * x_isz
                + 3 * Hout * tw_ * o_isz             # out block (2 bufs) + relayout
                + 2 * Hin * tw_ * 4                  # stage-1 f32 result + relayout
                + 2 * Hout * tw_ * 4)                # stage-2 f32 result + relayout

    fixed = 2 * (Hin * Hout + Win * Wout) * 4 + _SLACK_BYTES   # resident weights
    free = budget - fixed
    align = 8
    tw, n_j = Wout, 1
    pp = per_plane_bytes(h_first, Wout)
    if free < align * pp and Wout > 128:
        # Output planes too large for an un-tiled block: tile Wout in 128-lane
        # multiples (lane-dense stores) and switch to W-first so the stage-1
        # matmul is not recomputed per Wout tile.
        h_first = False
        denom = align * (Hout * (3 * o_isz + 8) + 8 * Hin)
        tw = max(free - align * 2 * Hin * Win * x_isz, 0) // max(denom, 1)
        tw = max(128, (tw // 128) * 128)
        tw = min(tw, Wout)
        n_j = _cdiv(Wout, tw)
        pp = per_plane_bytes(False, tw)
    bp = _choose_bp(NC, budget - fixed, pp, align)
    nb = _cdiv(NC, bp)

    if h_first:
        w1, w2 = whT.astype(mxu_dtype), wwt           # stage-1 matches x dtype
        w1_spec = pl.BlockSpec((Hin, Hout), lambda b, j: (0, 0))
        w2_spec = pl.BlockSpec((Win, Wout), lambda b, j: (0, 0))
        flops = 2 * NC * (Hout * Win * Hin + Hout * Win * Wout)
    else:
        w1, w2 = wwt.astype(mxu_dtype), whT
        w1_spec = pl.BlockSpec((Win, tw), lambda b, j: (0, j))
        w2_spec = pl.BlockSpec((Hin, Hout), lambda b, j: (0, 0))
        flops = 2 * NC * (Hin * Win * Wout + Hin * Hout * Wout)

    cost = pl.CostEstimate(
        flops=int(flops),
        transcendentals=0,
        bytes_accessed=int(NC * (Hin * Win * x_isz + Hout * Wout * o_isz)
                           + (Hin * Hout + Win * Wout) * 4))

    out3 = pl.pallas_call(
        functools.partial(_two_stage_kernel, h_first=h_first, mxu_dtype=mxu_dtype),
        out_shape=jax.ShapeDtypeStruct((NC, Hout, Wout), kernel_out_dtype),
        grid_spec=pltpu.PrefetchScalarGridSpec(
            num_scalar_prefetch=0,
            grid=(nb, n_j),
            in_specs=[
                w1_spec,
                w2_spec,
                pl.BlockSpec((bp, Hin, Win), lambda b, j: (b, 0, 0)),
            ],
            out_specs=pl.BlockSpec((bp, Hout, tw), lambda b, j: (b, 0, j)),
        ),
        compiler_params=pltpu.CompilerParams(
            dimension_semantics=("parallel", "parallel"),
            vmem_limit_bytes=int(vmem_limit)),
        cost_estimate=cost,
    )(w1, w2, x3)
    out = out3.reshape(N, C, Hout, Wout)
    return out if jnp.dtype(kernel_out_dtype) == orig_dtype else out.astype(orig_dtype)


if __name__ == "__main__":
    key = jax.random.PRNGKey(0)
    kx, kt = jax.random.split(key)

    N, C, Hin, Win = 2, 4, 8, 8
    Hout, Wout = 16, 16

    x = jax.random.normal(kx, (N, C, Hin, Win), dtype=jnp.float32)
    target = jax.random.normal(kt, (N, C, Hout, Wout), dtype=jnp.float32)

    # pure-JAX reference using the same interpolation matrices
    wh = _align_corners_matrix(Hout, Hin)
    ww = _align_corners_matrix(Wout, Win)
    ref = jnp.einsum('oh,nchw,pw->ncop', wh, x, ww, precision='highest')

    # Path A: fused Kron matmul (default for these sizes).
    out_a = jax.block_until_ready(upsample_predictor(x, target))
    assert out_a.shape == (N, C, Hout, Wout), out_a.shape
    assert out_a.dtype == x.dtype
    assert jnp.allclose(out_a, ref, atol=1e-4, rtol=1e-4), \
        float(jnp.max(jnp.abs(out_a - ref)))

    # Path B: two chained 2D MXU matmuls (forced by disabling the Kron path).
    out_b = jax.block_until_ready(upsample_predictor(x, target, kron_max_bytes=0))
    assert out_b.shape == (N, C, Hout, Wout), out_b.shape
    assert jnp.allclose(out_b, ref, atol=1e-4, rtol=1e-4), \
        float(jnp.max(jnp.abs(out_b - ref)))

    # Non-dividing plane count (NC=12 with an 8-plane block): exercises the
    # masked boundary block that replaced the old jnp.pad HBM copy.
    x2 = jax.random.normal(kt, (3, C, Hin, Win), dtype=jnp.float32)
    ref2 = jnp.einsum('oh,nchw,pw->ncop', wh, x2, ww, precision='highest')
    out_c = jax.block_until_ready(upsample_predictor(x2, target))
    assert out_c.shape == (3, C, Hout, Wout), out_c.shape
    assert jnp.allclose(out_c, ref2, atol=1e-4, rtol=1e-4), \
        float(jnp.max(jnp.abs(out_c - ref2)))

    print("KERNEL_OK")
</pallas_src>

<mosaic_0001>
module attributes {stable_mosaic.version = 11 : i64} {
  func.func @_kron_kernel(%arg0: i32, %arg1: memref<8x64xf32, #tpu.memory_space<vmem>>, %arg2: memref<64x256xf32, #tpu.memory_space<vmem>>, %arg3: memref<8x256xf32, #tpu.memory_space<vmem>>) attributes {dimension_semantics = [#tpu.dimension_semantics<parallel>], iteration_bounds = array<i64: 1>, scalar_prefetch = 0 : i64, scratch_operands = 0 : i64, tpu.core_type = #tpu.core_type<tc>, window_params = [{transform_indices = @transform_0, window_bounds = array<i64: 8, 64>}, {pipeline_mode = #tpu.pipeline_mode<synchronous>, transform_indices = @transform_1, window_bounds = array<i64: 64, 256>}, {transform_indices = @transform_2, window_bounds = array<i64: 8, 256>}]} {
    %c0 = arith.constant 0 : index
    %c0_0 = arith.constant 0 : index
    %0 = vector.load %arg1[%c0, %c0_0] : memref<8x64xf32, #tpu.memory_space<vmem>>, vector<8x64xf32>
    %c0_1 = arith.constant 0 : index
    %c0_2 = arith.constant 0 : index
    %1 = vector.load %arg2[%c0_1, %c0_2] : memref<64x256xf32, #tpu.memory_space<vmem>>, vector<64x256xf32>
    %cst = arith.constant dense<0.000000e+00> : vector<8x256xf32>
    %2 = tpu.matmul %0, %1, %cst {dimension_numbers = #tpu.dot_dimension_numbers<[1], [0], [0], [1], [0, 0, 1, 1], [], []>} : vector<8x64xf32>, vector<64x256xf32>, vector<8x256xf32> -> vector<8x256xf32>
    %c0_3 = arith.constant 0 : index
    %c0_4 = arith.constant 0 : index
    %3 = vector.load %arg3[%c0_3, %c0_4] : memref<8x256xf32, #tpu.memory_space<vmem>>, vector<8x256xf32>
    tpu.vector_store %arg3[%c0_3, %c0_4], %2 {strides = array<i32>} : memref<8x256xf32, #tpu.memory_space<vmem>>, vector<8x256xf32>,
    return
  }
  func.func @transform_0(%arg0: i32) -> (i32, i32) {
    %c0_i32 = arith.constant 0 : i32
    %c0_i32_0 = arith.constant 0 : i32
    return %arg0, %c0_i32 : i32, i32
  }
  func.func @transform_1(%arg0: i32) -> (i32, i32) {
    %c0_i32 = arith.constant 0 : i32
    %c0_i32_0 = arith.constant 0 : i32
    %c0_i32_1 = arith.constant 0 : i32
    return %c0_i32, %c0_i32_0 : i32, i32
  }
  func.func @transform_2(%arg0: i32) -> (i32, i32) {
    %c0_i32 = arith.constant 0 : i32
    %c0_i32_0 = arith.constant 0 : i32
    return %arg0, %c0_i32 : i32, i32
  }
}

</mosaic_0001>

<llo_original>
// kernel: tpu_custom_call.1
$region0: #{tpu_custom_call.1}
  #allocation0 [shape = 'u32[]', space=smem, size = 0x4, offset = 0x4, fixed_abs, tag = 'smem constant byte address 0x4 - core index']
  #allocation1 [shape = 'u32[144,128]{1,0:T(1,128)}', space=vmem, size = 0x12000, scoped, tag = 'internal scratch']
  %s0 = inlined_call_operand.hbm [shape: f32[8,64], index: 0, kind: input, shape index: {}]
  %s1 = inlined_call_operand.hbm [shape: f32[64,256], index: 1, kind: input, shape index: {}]
  %s2 = inlined_call_operand.hbm [shape: f32[8,256], index: 2, kind: output, shape index: {}]
  %s3 = sld [smem:[#allocation0]]
  $region26: #{tpu_custom_call.1} parent=0
    _
  %s5 = ssub.s32 1, %s3
  %s6 = scalar_select 0, %s5, %s3
  $region1: #{tpu_custom_call.1} parent=0
    #allocation2 [shape = 'u8[4096]{0}', space=vmem, size = 0x1000, scoped, tag = 'input window, operand 0, single buffered']
    #allocation3 [shape = 's32[1]{0}', space=sflag, size = 0x4, scoped, tag = 'scoped memory for tpu_custom_call.1']
    #allocation4 [shape = 's32[1]{0}', space=sflag, size = 0x4, scoped, tag = 'scoped memory for tpu_custom_call.1']
    #allocation5 [shape = 'u8[65536]{0}', space=vmem, size = 0x10000, scoped, tag = 'input window, operand 1, single buffered']
    #allocation6 [shape = 's32[1]{0}', space=sflag, size = 0x4, scoped, tag = 'scoped memory for tpu_custom_call.1']
    #allocation7 [shape = 'u8[8192]{0}', space=vmem, size = 0x2000, scoped, tag = 'output window, operand 0, single buffered']
    %7 = vsyncpa [#allocation3], 0
    %8 = vsyncpa [#allocation6], 0
    %9 = vsyncpa [#allocation4], 0
    // Predicated region
    $region2: #{tpu_custom_call.1} parent=1 // pred_check
      _
    $region3: #{tpu_custom_call.1} parent=1 // pred_check_branch
      %11 = sbr.rel (0) target = $region5
    $region4: #{tpu_custom_call.1} parent=1 // pred_region
      %s13 = ssub.s32 128, 128
      %14 = vsyncadd [#allocation3], %s13
      %s16 = sshll.u32 [#allocation2], 4
      %s17 = int_to_ptr.vmem [resolvable:$true] %s16
      %19 = dma.hbm_to_vmem [thread:$0]  %s0, 128, %s17, [#allocation3]
    $region5: #{tpu_custom_call.1} parent=1 // pred_fallthru
      _
    // Predicated region
    $region6: #{tpu_custom_call.1} parent=1 // pred_check
      _
    $region7: #{tpu_custom_call.1} parent=1 // pred_check_branch
      %21 = sbr.rel (0) target = $region9
    $region8: #{tpu_custom_call.1} parent=1 // pred_region
      %s23 = ssub.s32 2048, 2048
      %24 = vsyncadd [#allocation6], %s23
      %s25 = sshll.u32 [#allocation5], 4
      %s26 = int_to_ptr.vmem [resolvable:$true] %s25
      %31 = dma.hbm_to_vmem [thread:$0]  %s1, 2048, %s26, [#allocation6], 256, 256, 16
    $region9: #{tpu_custom_call.1} parent=1 // pred_fallthru
      _
    // Predicated region
    $region10: #{tpu_custom_call.1} parent=1 // pred_check
      _
    $region11: #{tpu_custom_call.1} parent=1 // pred_check_branch
      %33 = sbr.rel (0) target = $region13
    $region12: #{tpu_custom_call.1} parent=1 // pred_region
      %34 = dma.done [#allocation3], 128
    $region13: #{tpu_custom_call.1} parent=1 // pred_fallthru
      _
    // Predicated region
    $region14: #{tpu_custom_call.1} parent=1 // pred_check
      _
    $region15: #{tpu_custom_call.1} parent=1 // pred_check_branch
      %36 = sbr.rel (0) target = $region17
    $region16: #{tpu_custom_call.1} parent=1 // pred_region
      %37 = dma.done [#allocation6], 2048
    $region17: #{tpu_custom_call.1} parent=1 // pred_fallthru
      _
    %v38 = vld [vmem:[#allocation2] sm:$0xff]
    %v39 = vld [vmem:[#allocation5] sm:$0xff]
    %v40 = vld [vmem:[#allocation5 + $0x8] sm:$0xff]
    %v41 = vld [vmem:[#allocation5 + $0x10] sm:$0xff]
    %v42 = vld [vmem:[#allocation5 + $0x18] sm:$0xff]
    %v43 = vld [vmem:[#allocation5 + $0x20] sm:$0xff]
    %v44 = vld [vmem:[#allocation5 + $0x28] sm:$0xff]
    %v45 = vld [vmem:[#allocation5 + $0x30] sm:$0xff]
    %v46 = vld [vmem:[#allocation5 + $0x38] sm:$0xff]
    %v47 = vld [vmem:[#allocation5 + $0x40] sm:$0xff]
    %v48 = vld [vmem:[#allocation5 + $0x48] sm:$0xff]
    %v49 = vld [vmem:[#allocation5 + $0x50] sm:$0xff]
    %v50 = vld [vmem:[#allocation5 + $0x58] sm:$0xff]
    %v51 = vld [vmem:[#allocation5 + $0x60] sm:$0xff]
    %v52 = vld [vmem:[#allocation5 + $0x68] sm:$0xff]
    %v53 = vld [vmem:[#allocation5 + $0x70] sm:$0xff]
    %v54 = vld [vmem:[#allocation5 + $0x78] sm:$0xff]
    %vm55 = vcmask 523264
    %v57 = vsel %vm55, %v38, 0
    %59 = vmatprep.subr.mxu0 %v40
    %60 = vmatpush1.msra.mxu0 %v39
    %61 = vmatprep.subr.mxu0 %v42
    %62 = vmatpush1.msra.mxu0 %v41
    %63 = vmatprep.subr.mxu0 %v44
    %64 = vmatpush1.msra.mxu0 %v43
    %65 = vmatprep.subr.mxu0 %v46
    %66 = vmatpush1.msra.mxu0 %v45
    %67 = vmatprep.subr.mxu0 %v48
    %68 = vmatpush1.msra.mxu0 %v47
    %69 = vmatprep.subr.mxu0 %v50
    %70 = vmatpush1.msra.mxu0 %v49
    %71 = vmatprep.subr.mxu0 %v52
    %72 = vmatpush1.msra.mxu0 %v51
    %73 = vmatprep.subr.mxu0 %v54
    %74 = vmatpush1.msra.mxu0 %v53
    %75 = vmatprep.subr.mxu0 0.0
    %76 = vmatpush1.msra.mxu0 0.0
    %77 = vmatprep.subr.mxu0 0.0
    %78 = vmatpush1.msra.mxu0 0.0
    %79 = vmatprep.subr.mxu0 0.0
    %80 = vmatpush1.msra.mxu0 0.0
    %81 = vmatprep.subr.mxu0 0.0
    %82 = vmatpush1.msra.mxu0 0.0
    %83 = vmatprep.subr.mxu0 0.0
    %84 = vmatpush1.msra.mxu0 0.0
    %85 = vmatprep.subr.mxu0 0.0
    %86 = vmatpush1.msra.mxu0 0.0
    %87 = vmatprep.subr.mxu0 0.0
    %88 = vmatpush1.msra.mxu0 0.0
    %89 = vmatprep.subr.mxu0 0.0
    %90 = vmatpush1.msra.mxu0 0.0
    %91 = vmatprep.subr.mxu0 0.0
    %92 = vmatpush1.msra.mxu0 0.0
    %93 = vmatprep.subr.mxu0 0.0
    %94 = vmatpush1.msra.mxu0 0.0
    %95 = vmatprep.subr.mxu0 0.0
    %96 = vmatpush1.msra.mxu0 0.0
    %97 = vmatprep.subr.mxu0 0.0
    %98 = vmatpush1.msra.mxu0 0.0
    %99 = vmatprep.subr.mxu0 0.0
    %100 = vmatpush1.msra.mxu0 0.0
    %101 = vmatprep.subr.mxu0 0.0
    %102 = vmatpush1.msra.mxu0 0.0
    %103 = vmatprep.subr.mxu0 0.0
    %104 = vmatpush1.msra.mxu0 0.0
    %105 = vmatprep.subr.mxu0 0.0
    %106 = vmatpush1.msra.mxu0 0.0
    %107 = vmatprep.subr.mxu0 0.0
    %108 = vmatpush1.msra.mxu0 0.0
    %109 = vmatprep.subr.mxu0 0.0
    %110 = vmatpush1.msra.mxu0 0.0
    %111 = vmatprep.subr.mxu0 0.0
    %112 = vmatpush1.msra.mxu0 0.0
    %113 = vmatprep.subr.mxu0 0.0
    %114 = vmatpush1.msra.mxu0 0.0
    %115 = vmatprep.subr.mxu0 0.0
    %116 = vmatpush1.msra.mxu0 0.0
    %117 = vmatprep.subr.mxu0 0.0
    %118 = vmatpush1.msra.mxu0 0.0
    %119 = vmatprep.subr.mxu0 0.0
    %120 = vmatpush1.msra.mxu0 0.0
    %121 = vmatprep.subr.mxu0 0.0
    %122 = vmatpush1.msra.mxu0 0.0
    %123 = vmatprep.mubr.f32.mxu0 0.0
    %124 = vmatmul.mubr.f32.gmra.mrb[0].mxu0 %v57
    %v125 = vpop.f32.mrb[0].mxu0
    %v126 = vadd.f32 0.0, %v125
    %v127 = vpop.f32.mrb[0].mxu0
    %v128 = vadd.f32 0.0, %v127
    %129 = vdwg.mxu0
    %130 = vst [vmem:[#allocation7] sm:$0xff] %v126
    %131 = vst [vmem:[#allocation7 + $0x8] sm:$0xff] %v128
    // Predicated region
    $region18: #{tpu_custom_call.1} parent=1 // pred_check
      _
    $region19: #{tpu_custom_call.1} parent=1 // pred_check_branch
      %133 = sbr.rel (0) target = $region21
    $region20: #{tpu_custom_call.1} parent=1 // pred_region
      %s135 = ssub.s32 256, 256
      %136 = vsyncadd [#allocation4], %s135
      %s138 = sshll.u32 [#allocation7], 4
      %s139 = int_to_ptr.vmem [resolvable:$true] %s138
      %141 = dma.vmem_to_hbm [thread:$0]  %s139, 256, %s2, [#allocation4]
    $region21: #{tpu_custom_call.1} parent=1 // pred_fallthru
      _
    // Predicated region
    $region22: #{tpu_custom_call.1} parent=1 // pred_check
      _
    $region23: #{tpu_custom_call.1} parent=1 // pred_check_branch
      %143 = sbr.rel (0) target = $region25
    $region24: #{tpu_custom_call.1} parent=1 // pred_region
      %144 = dma.done [#allocation4], 256
    $region25: #{tpu_custom_call.1} parent=1 // pred_fallthru
      _
    %145 = vsyncpa [#allocation3], 1
    %146 = vsyncpa [#allocation6], 1
    %147 = vsyncpa [#allocation4], 1

</llo_original>
